<compile_context>
chip_gen: v5e
topology: v5e:2x2
jax: 0.10.0
libtpu: 0.0.40
codegen_flags: <defaults>
</compile_context>

<pallas_src>
import functools

import jax
import jax.numpy as jnp
from jax.experimental import pallas as pl
from jax.experimental.pallas import tpu as pltpu

REM_LAMBDA = 0.5      # deterministic stand-in for the config lookup


def _round_up(x, m):
    return ((x + m - 1) // m) * m


def _lse_kernel(logits_ref, lse_ref, m_sc, s_sc, *, tc, c):
    """One (row-tile, class-tile) grid step of a streaming log-sum-exp.

    logits_ref : (tm, tc) native dtype (bf16/f32) in VMEM
    lse_ref    : (tm, 1)  f32 per-row log-sum-exp (written on the last class tile)
    m_sc/s_sc  : (tm, 1)  f32 running max / running sum-of-exp scratch
    """
    j = pl.program_id(1)
    nc = pl.num_programs(1)

    @pl.when(j == 0)
    def _():
        m_sc[...] = jnp.full(m_sc.shape, -jnp.inf, m_sc.dtype)
        s_sc[...] = jnp.zeros(s_sc.shape, s_sc.dtype)

    def update(x_f32, tile_max_f32, valid=None):
        m_old = m_sc[...]
        m_new = jnp.maximum(m_old, tile_max_f32)
        e = jnp.exp(x_f32 - m_new)
        if valid is not None:
            e = jnp.where(valid, e, 0.0)
        s_sc[...] = (s_sc[...] * jnp.exp(m_old - m_new)
                     + jnp.sum(e, axis=-1, keepdims=True))
        m_sc[...] = m_new

    def full_tile():
        x_nat = logits_ref[...]
        # Max is exact in the native dtype (cheap packed reduce on bf16 HW);
        # the exp/sum math runs in f32.
        tile_max = jnp.max(x_nat, axis=-1, keepdims=True).astype(jnp.float32)
        update(x_nat.astype(jnp.float32), tile_max)

    tail = c % tc   # static: #valid columns in the last class tile (0 if aligned)
    if tail == 0:
        full_tile()
    else:
        @pl.when(j < nc - 1)
        def _():
            full_tile()

        @pl.when(j == nc - 1)
        def _():
            # Ragged last class tile: columns >= tail are out-of-bounds garbage.
            x = logits_ref[...].astype(jnp.float32)
            valid = jax.lax.broadcasted_iota(jnp.int32, x.shape, 1) < tail
            tile_max = jnp.max(jnp.where(valid, x, -jnp.inf), axis=-1, keepdims=True)
            update(x, tile_max, valid)

    @pl.when(j == nc - 1)
    def _():
        lse_ref[...] = m_sc[...] + jnp.log(s_sc[...])


def remover_loss(logits, targets, rem_lambda=REM_LAMBDA, *, tm_max=512, tc_max=4096):
    """Pallas equivalent of F.cross_entropy(logits, targets) * rem_lambda."""
    n, c = logits.shape
    itemsize = jnp.dtype(logits.dtype).itemsize

    # ---- row tile: multiple of 8; keep >=2 row blocks when N allows (megacore) ----
    n8 = _round_up(n, 8)
    tm = min(n8, tm_max)
    if pl.cdiv(n8, tm) < 2 and n8 > 8:
        tm = max(8, _round_up(pl.cdiv(n8, 2), 8))

    # ---- class tile: full width if it fits, else a multiple of 128 sized so the
    #      per-tile HBM bytes are ~constant regardless of input dtype ----
    tc_cap = tc_max if itemsize <= 2 else max(128, tc_max // 2)
    tc_cap = max(128, (tc_cap // 128) * 128)
    tc = c if c <= tc_cap else tc_cap

    grid = (pl.cdiv(n, tm), pl.cdiv(c, tc))

    cost = pl.CostEstimate(
        flops=4 * n * c,
        transcendentals=n * c,
        bytes_accessed=n * c * itemsize + n * 4,
    )

    lse = pl.pallas_call(
        functools.partial(_lse_kernel, tc=tc, c=c),
        out_shape=jax.ShapeDtypeStruct((n, 1), jnp.float32),
        grid=grid,
        in_specs=[pl.BlockSpec((tm, tc), lambda i, j: (i, j))],   # logits tile
        out_specs=pl.BlockSpec((tm, 1), lambda i, j: (i, 0)),     # per-row LSE
        scratch_shapes=[
            pltpu.VMEM((tm, 1), jnp.float32),   # running max
            pltpu.VMEM((tm, 1), jnp.float32),   # running sum of exp
        ],
        compiler_params=pltpu.CompilerParams(
            dimension_semantics=("parallel", "arbitrary"),
            vmem_limit_bytes=48 * 1024 * 1024,
        ),
        cost_estimate=cost,
    )(logits)

    # Target-logit gather in plain JAX (N elements of HBM traffic);
    # mean + rem_lambda folded into a single scale constant.
    picked = jnp.take_along_axis(
        logits, targets.astype(jnp.int32)[:, None], axis=-1)[:, 0].astype(jnp.float32)
    return jnp.sum(lse[:, 0] - picked) * jnp.float32(rem_lambda / n)


def _reference_loss(logits, targets, rem_lambda=REM_LAMBDA):
    # Plain-JAX reference (mean-reduced cross-entropy, same f32 math path).
    x = logits.astype(jnp.float32)
    lse = jax.nn.logsumexp(x, axis=-1)
    picked = jnp.take_along_axis(x, targets[:, None].astype(jnp.int32), axis=-1)[:, 0]
    return jnp.mean(lse - picked) * rem_lambda


if __name__ == "__main__":
    key = jax.random.PRNGKey(0)
    k1, k2, k3, k4 = jax.random.split(key, 4)

    # Case 1: small shapes implied by the module (batch=8, 32 classes), bf16 logits
    # streamed through the kernel in their native dtype (single full-width tile).
    N, C = 8, 32
    logits = jax.random.normal(k1, (N, C), dtype=jnp.bfloat16)
    targets = jax.random.randint(k2, (N,), 0, C, dtype=jnp.int32)
    loss = jax.block_until_ready(remover_loss(logits, targets))
    ref = jax.block_until_ready(_reference_loss(logits, targets))
    assert jnp.allclose(loss, ref, rtol=1e-4, atol=1e-5), (loss, ref)

    # Case 2: exercises the ragged class tile (160 = 128 + 32, no host padding),
    # the ragged row tile, and the >=2-row-block megacore split.
    N2, C2 = 20, 160
    logits2 = jax.random.normal(k3, (N2, C2), dtype=jnp.bfloat16)
    targets2 = jax.random.randint(k4, (N2,), 0, C2, dtype=jnp.int32)
    loss2 = jax.block_until_ready(remover_loss(logits2, targets2, tc_max=128))
    ref2 = jax.block_until_ready(_reference_loss(logits2, targets2))
    assert jnp.allclose(loss2, ref2, rtol=1e-4, atol=1e-5), (loss2, ref2)

    print("KERNEL_OK")
</pallas_src>

<mosaic_0001>
module attributes {stable_mosaic.version = 11 : i64} {
  func.func @_lse_kernel(%arg0: i32, %arg1: i32, %arg2: memref<8x32xbf16, #tpu.memory_space<vmem>>, %arg3: memref<8x1xf32, #tpu.memory_space<vmem>>, %arg4: memref<8x1xf32, #tpu.memory_space<vmem>>, %arg5: memref<8x1xf32, #tpu.memory_space<vmem>>) attributes {dimension_semantics = [#tpu.dimension_semantics<parallel>, #tpu.dimension_semantics<arbitrary>], iteration_bounds = array<i64: 1, 1>, scalar_prefetch = 0 : i64, scratch_operands = 2 : i64, tpu.core_type = #tpu.core_type<tc>, window_params = [{transform_indices = @transform_0, window_bounds = array<i64: 8, 32>}, {transform_indices = @transform_1, window_bounds = array<i64: 8, 1>}]} {
    %c0_i32 = arith.constant 0 : i32
    %0 = arith.cmpi eq, %arg1, %c0_i32 : i32
    %1 = arith.extui %0 : i1 to i32
    %c0_i32_0 = arith.constant 0 : i32
    %2 = arith.cmpi ne, %1, %c0_i32_0 : i32
    scf.if %2 {
      %cst_13 = arith.constant 0xFF800000 : f32
      %25 = vector.broadcast %cst_13 : f32 to vector<8x1xf32>
      %c0_14 = arith.constant 0 : index
      %c0_15 = arith.constant 0 : index
      %26 = vector.load %arg4[%c0_14, %c0_15] : memref<8x1xf32, #tpu.memory_space<vmem>>, vector<8x1xf32>
      tpu.vector_store %arg4[%c0_14, %c0_15], %25 {strides = array<i32>} : memref<8x1xf32, #tpu.memory_space<vmem>>, vector<8x1xf32>,
      %cst_16 = arith.constant 0.000000e+00 : f32
      %27 = vector.broadcast %cst_16 : f32 to vector<8x1xf32>
      %c0_17 = arith.constant 0 : index
      %c0_18 = arith.constant 0 : index
      %28 = vector.load %arg5[%c0_17, %c0_18] : memref<8x1xf32, #tpu.memory_space<vmem>>, vector<8x1xf32>
      tpu.vector_store %arg5[%c0_17, %c0_18], %27 {strides = array<i32>} : memref<8x1xf32, #tpu.memory_space<vmem>>, vector<8x1xf32>,
    } else {
    }
    %c0 = arith.constant 0 : index
    %c0_1 = arith.constant 0 : index
    %3 = vector.load %arg2[%c0, %c0_1] : memref<8x32xbf16, #tpu.memory_space<vmem>>, vector<8x32xbf16>
    %cst = arith.constant dense<0xFF80> : vector<8xbf16>
    %4 = vector.multi_reduction <maximumf>, %3, %cst [1] : vector<8x32xbf16> to vector<8xbf16>
    %5 = vector.shape_cast %4 : vector<8xbf16> to vector<8x1xbf16>
    %6 = arith.extf %5 : vector<8x1xbf16> to vector<8x1xf32>
    %7 = arith.extf %3 : vector<8x32xbf16> to vector<8x32xf32>
    %c0_2 = arith.constant 0 : index
    %c0_3 = arith.constant 0 : index
    %8 = vector.load %arg4[%c0_2, %c0_3] : memref<8x1xf32, #tpu.memory_space<vmem>>, vector<8x1xf32>
    %9 = arith.maximumf %8, %6 : vector<8x1xf32>
    %10 = vector.broadcast %9 : vector<8x1xf32> to vector<8x32xf32>
    %11 = arith.subf %7, %10 : vector<8x32xf32>
    %12 = math.exp %11 : vector<8x32xf32>
    %c0_4 = arith.constant 0 : index
    %c0_5 = arith.constant 0 : index
    %13 = vector.load %arg5[%c0_4, %c0_5] : memref<8x1xf32, #tpu.memory_space<vmem>>, vector<8x1xf32>
    %14 = arith.subf %8, %9 : vector<8x1xf32>
    %15 = math.exp %14 : vector<8x1xf32>
    %16 = arith.mulf %13, %15 : vector<8x1xf32>
    %cst_6 = arith.constant dense<0.000000e+00> : vector<8xf32>
    %17 = vector.multi_reduction <add>, %12, %cst_6 [1] : vector<8x32xf32> to vector<8xf32>
    %18 = vector.shape_cast %17 : vector<8xf32> to vector<8x1xf32>
    %19 = arith.addf %16, %18 : vector<8x1xf32>
    %c0_7 = arith.constant 0 : index
    %c0_8 = arith.constant 0 : index
    %20 = vector.load %arg5[%c0_7, %c0_8] : memref<8x1xf32, #tpu.memory_space<vmem>>, vector<8x1xf32>
    tpu.vector_store %arg5[%c0_7, %c0_8], %19 {strides = array<i32>} : memref<8x1xf32, #tpu.memory_space<vmem>>, vector<8x1xf32>,
    %c0_9 = arith.constant 0 : index
    %c0_10 = arith.constant 0 : index
    %21 = vector.load %arg4[%c0_9, %c0_10] : memref<8x1xf32, #tpu.memory_space<vmem>>, vector<8x1xf32>
    tpu.vector_store %arg4[%c0_9, %c0_10], %9 {strides = array<i32>} : memref<8x1xf32, #tpu.memory_space<vmem>>, vector<8x1xf32>,
    %c0_i32_11 = arith.constant 0 : i32
    %22 = arith.cmpi eq, %arg1, %c0_i32_11 : i32
    %23 = arith.extui %22 : i1 to i32
    %c0_i32_12 = arith.constant 0 : i32
    %24 = arith.cmpi ne, %23, %c0_i32_12 : i32
    scf.if %24 {
      %c0_13 = arith.constant 0 : index
      %c0_14 = arith.constant 0 : index
      %25 = vector.load %arg4[%c0_13, %c0_14] : memref<8x1xf32, #tpu.memory_space<vmem>>, vector<8x1xf32>
      %c0_15 = arith.constant 0 : index
      %c0_16 = arith.constant 0 : index
      %26 = vector.load %arg5[%c0_15, %c0_16] : memref<8x1xf32, #tpu.memory_space<vmem>>, vector<8x1xf32>
      %27 = math.log %26 : vector<8x1xf32>
      %28 = arith.addf %25, %27 : vector<8x1xf32>
      %c0_17 = arith.constant 0 : index
      %c0_18 = arith.constant 0 : index
      %29 = vector.load %arg3[%c0_17, %c0_18] : memref<8x1xf32, #tpu.memory_space<vmem>>, vector<8x1xf32>
      tpu.vector_store %arg3[%c0_17, %c0_18], %28 {strides = array<i32>} : memref<8x1xf32, #tpu.memory_space<vmem>>, vector<8x1xf32>,
    } else {
    }
    return
  }
  func.func @transform_0(%arg0: i32, %arg1: i32) -> (i32, i32) {
    %c0_i32 = arith.constant 0 : i32
    return %arg0, %arg1 : i32, i32
  }
  func.func @transform_1(%arg0: i32, %arg1: i32) -> (i32, i32) {
    %c0_i32 = arith.constant 0 : i32
    %c0_i32_0 = arith.constant 0 : i32
    return %arg0, %c0_i32 : i32, i32
  }
}

</mosaic_0001>

<llo_original>
// kernel: tpu_custom_call.1
$region0: #{tpu_custom_call.1}
  #allocation0 [shape = 'u32[]', space=smem, size = 0x4, offset = 0x4, fixed_abs, tag = 'smem constant byte address 0x4 - core index']
  #allocation1 [shape = 'u32[72,128]{1,0:T(1,128)}', space=vmem, size = 0x9000, scoped, tag = 'internal scratch']
  #allocation2 [shape = 'f32[8,1]{1,0:T(8,128)}', space=vmem, size = 0x1000, scoped, tag = 'scratch operand']
  #allocation3 [shape = 'f32[8,1]{1,0:T(8,128)}', space=vmem, size = 0x1000, scoped, tag = 'scratch operand']
  %s0 = inlined_call_operand.hbm [shape: bf16[8,32], index: 0, kind: input, shape index: {}]
  %s1 = inlined_call_operand.vmem [shape: f32[8,1], index: 1, kind: output, shape index: {}]
  %s2 = sld [smem:[#allocation0]]
  $region26: #{tpu_custom_call.1} parent=0
    _
  %s4 = ssub.s32 1, %s2
  %s5 = scalar_select 0, %s4, %s2
  $region1: #{tpu_custom_call.1} parent=0
    #allocation4 [shape = 'u8[2048]{0}', space=vmem, size = 0x800, scoped, tag = 'input window, operand 0, single buffered']
    #allocation5 [shape = 's32[1]{0}', space=sflag, size = 0x4, scoped, tag = 'scoped memory for tpu_custom_call.1']
    %6 = vsyncpa [#allocation5], 0
    // Predicated region
    $region2: #{tpu_custom_call.1} parent=1 // pred_check
      _
    $region3: #{tpu_custom_call.1} parent=1 // pred_check_branch
      %8 = sbr.rel (0) target = $region5
    $region4: #{tpu_custom_call.1} parent=1 // pred_region
      %10 = vsyncadd [#allocation5], 0
      %s12 = sshll.u32 %s0, 4
      %s13 = int_to_ptr.hbm [resolvable:$true] %s12
      %s14 = sshll.u32 [#allocation4], 4
      %s15 = int_to_ptr.vmem [resolvable:$true] %s14
      %17 = dma.hbm_to_vmem [thread:$0]  %s13, 64, %s15, [#allocation5]
    $region5: #{tpu_custom_call.1} parent=1 // pred_fallthru
      _
    // Predicated region
    $region6: #{tpu_custom_call.1} parent=1 // pred_check
      _
    $region7: #{tpu_custom_call.1} parent=1 // pred_check_branch
      %19 = sbr.rel (0) target = $region9
    $region8: #{tpu_custom_call.1} parent=1 // pred_region
      %21 = dma.done [#allocation5], 64
    $region9: #{tpu_custom_call.1} parent=1 // pred_fallthru
      _
    %p22 = scmp.eq.s32.totalorder 0, 0
    // Predicated region
    $region10: #{tpu_custom_call.1} parent=1 // pred_check
      %p23 = pneg %p22
    $region11: #{tpu_custom_call.1} parent=1 // pred_check_branch
      %25 = sbr.rel (%p23) target = $region13
    $region12: #{tpu_custom_call.1} parent=1 // pred_region
      %vm26 = vcmask 7168
      %27 = vst.msk [vmem:[#allocation2] sm:$0xff] %vm26, -inf
      %28 = vst.msk [vmem:[#allocation3] sm:$0xff] %vm26, 0.0
    $region13: #{tpu_custom_call.1} parent=1 // pred_fallthru
      _
    %v29 = vld [vmem:[#allocation4] sm:$0xf]
    %v30 = vunpack.c.l.bf16 %v29
    %vm31 = vcmask 261120
    %v32 = vsel %vm31, %v30, -inf
    %33 = vmax.xlane.f32.xlu0 %v32
    %v34 = vpop.xlane.xlu0 %33
    %v35 = vpack.c.bf16 %v34, %v34
    %v36 = vunpack.c.l.bf16 %v35
    %v37 = vld [vmem:[#allocation2] sm:$0xff]
    %v38 = vmax.f32 %v37, %v36
    %40 = vset.pattern.permute.xlu0 0
    %41 = vperm.xlu0 %40, %v38
    %v42 = vpop.permute.xlu0 %41
    %v44 = vsub.f32 %v30, %v42
    %v45 = vmul.f32 %v44, 1.442695
    %v46 = vpow.pop %v45
    %v47 = vld [vmem:[#allocation3] sm:$0xff]
    %v48 = vsub.f32 %v37, %v38
    %v49 = vmul.f32 %v48, 1.442695
    %v50 = vpow.pop %v49
    %v51 = vmul.f32 %v47, %v50
    %v52 = vsel %vm31, %v46, 0.0
    %53 = vadd.xlane.f32.xlu0 %v52
    %v54 = vpop.xlane.xlu0 %53
    %v55 = vadd.f32 %v51, %v54
    %vm56 = vcmask 7168
    %57 = vst.msk [vmem:[#allocation3] sm:$0xff] %vm56, %v55
    %58 = vst.msk [vmem:[#allocation2] sm:$0xff] %vm56, %v38
    // Predicated region
    $region14: #{tpu_custom_call.1} parent=1 // pred_check
      %p59 = pneg %p22
    $region15: #{tpu_custom_call.1} parent=1 // pred_check_branch
      %61 = sbr.rel (%p59) target = $region17
    $region16: #{tpu_custom_call.1} parent=1 // pred_region
      %v62 = vld [vmem:[#allocation2] sm:$0xff]
      %v63 = vld [vmem:[#allocation3] sm:$0xff]
      %v64 = vlog2.pop %v63
      %v65 = vmul.f32 %v64, 0.6931472
      %v66 = vadd.f32 %v62, %v65
      %67 = vst.msk [vmem:[%s1] sm:$0xff] %vm56, %v66
    $region17: #{tpu_custom_call.1} parent=1 // pred_fallthru
      _
    // Predicated region
    $region18: #{tpu_custom_call.1} parent=1 // pred_check
      _
    $region19: #{tpu_custom_call.1} parent=1 // pred_check_branch
      %69 = sbr.rel (0) target = $region21
    $region20: #{tpu_custom_call.1} parent=1 // pred_region
      _
    $region21: #{tpu_custom_call.1} parent=1 // pred_fallthru
      _
    // Predicated region
    $region22: #{tpu_custom_call.1} parent=1 // pred_check
      _
    $region23: #{tpu_custom_call.1} parent=1 // pred_check_branch
      %71 = sbr.rel (0) target = $region25
    $region24: #{tpu_custom_call.1} parent=1 // pred_region
      _
    $region25: #{tpu_custom_call.1} parent=1 // pred_fallthru
      _
    %72 = vsyncpa [#allocation5], 1

</llo_original>
